<compile_context>
chip_gen: v7x
topology: tpu7x:2x2x1
jax: 0.10.0
libtpu: 0.0.40
codegen_flags: <defaults>
</compile_context>

<pallas_src>
import jax
import jax.numpy as jnp
from jax.experimental import pallas as pl
from jax.experimental.pallas import tpu as pltpu


def _round_up(a: int, b: int) -> int:
    return ((a + b - 1) // b) * b


def _nconv_kernel(a_ref, x_ref, o_ref):
    # a_ref: (W, V)     A^T, VMEM-resident across the whole grid.
    # x_ref: (TB, V, L) one batch tile of x in native layout.
    # o_ref: (TB, W, L) matching output tile.
    def body(b, carry):
        o_ref[b] = jnp.dot(
            a_ref[...], x_ref[b], preferred_element_type=jnp.float32
        ).astype(o_ref.dtype)
        return carry

    jax.lax.fori_loop(0, x_ref.shape[0], body, 0)


def nconv(x, A, *, tile_b=None, compute_dtype=None,
          vmem_limit_bytes=32 * 1024 * 1024):
    """out[n,c,w,l] = sum_v x[n,c,v,l] * A[v,w];  x: (N,C,V,L), A: (V,W)."""
    N, C, V, L = x.shape
    V2, W = A.shape
    assert V == V2, "contraction dim mismatch"
    out_dtype = x.dtype

    if compute_dtype is not None:
        # NOTE: casting here costs an extra HBM pass of x unless the caller's
        # producer already emits compute_dtype — prefer passing x already narrow.
        x = x.astype(compute_dtype)
        A = A.astype(compute_dtype)
    elif A.dtype != x.dtype:
        A = A.astype(x.dtype)

    B = N * C
    x_b = x.reshape(B, V, L)   # free: merges adjacent leading dims, no data movement
    a_wv = A.T                 # (W, V), tiny; stays resident in VMEM

    in_item = jnp.dtype(x_b.dtype).itemsize
    out_item = jnp.dtype(out_dtype).itemsize

    # Per-batch-element VMEM footprint of the x / out slabs, including the
    # (8, 128) sublane/lane padding of the minor (V, L) / (W, L) dims.
    x_slab = _round_up(V, 8) * _round_up(L, 128) * in_item
    o_slab = _round_up(W, 8) * _round_up(L, 128) * out_item

    if tile_b is None:
        # ~24 MiB for the double-buffered x/out tiles; A + headroom fit in the
        # remaining ~8 MiB of the 32 MiB scoped VMEM limit.
        budget = 24 * 1024 * 1024
        tb = budget // (2 * (x_slab + o_slab))
    else:
        tb = tile_b
    tb = max(1, min(tb, B))
    if tb >= 8:
        tb = (tb // 8) * 8

    grid_b = pl.cdiv(B, tb)
    # Prefer an even number of grid steps so v7x's two TensorCores split the
    # single "parallel" axis evenly (no straggler step).
    if grid_b > 1 and grid_b % 2 == 1:
        cand = max(1, pl.cdiv(B, grid_b + 1))
        if cand >= 8:
            cand = _round_up(cand, 8)
        if pl.cdiv(B, cand) % 2 == 0:
            tb = cand
            grid_b = pl.cdiv(B, tb)

    cost = pl.CostEstimate(
        flops=2 * B * V * W * L,
        bytes_accessed=B * V * L * in_item + B * W * L * out_item + V * W * in_item,
        transcendentals=0,
    )

    out_b = pl.pallas_call(
        _nconv_kernel,
        out_shape=jax.ShapeDtypeStruct((B, W, L), out_dtype),
        grid_spec=pltpu.PrefetchScalarGridSpec(
            num_scalar_prefetch=0,
            grid=(grid_b,),
            in_specs=[
                pl.BlockSpec((W, V), lambda i: (0, 0)),         # A^T resident
                pl.BlockSpec((tb, V, L), lambda i: (i, 0, 0)),  # native-layout batch tile
            ],
            out_specs=pl.BlockSpec((tb, W, L), lambda i: (i, 0, 0)),
        ),
        compiler_params=pltpu.CompilerParams(
            dimension_semantics=("parallel",),
            vmem_limit_bytes=vmem_limit_bytes,
        ),
        cost_estimate=cost,
    )(a_wv, x_b)

    # Free reshape: splits the leading dim back into (N, C).  Output is already
    # contiguous (PyTorch's .contiguous() is a no-op here).
    return out_b.reshape(N, C, W, L)


if __name__ == "__main__":
    key = jax.random.PRNGKey(0)
    kx, ka = jax.random.split(key)

    # Small shapes consistent with the einsum: batch N=2, channels C=4,
    # V=16 graph nodes, W=16 output nodes, L=16 time steps.
    N, C, V, W, L = 2, 4, 16, 16, 16
    x = jax.random.normal(kx, (N, C, V, L), dtype=jnp.float32)
    A = jax.random.normal(ka, (V, W), dtype=jnp.float32)

    out = jax.jit(nconv)(x, A)
    out = jax.block_until_ready(out)

    ref = jnp.einsum("ncvl,vw->ncwl", x, A)
    assert out.shape == (N, C, W, L)
    assert jnp.allclose(out, ref, atol=1e-4, rtol=1e-4), "mismatch vs reference einsum"

    print("KERNEL_OK")
</pallas_src>

<mosaic_0001>
module attributes {stable_mosaic.version = 11 : i64} {
  func.func @_nconv_kernel(%arg0: i32, %arg1: memref<16x16xf32, #tpu.memory_space<vmem>>, %arg2: memref<8x16x16xf32, #tpu.memory_space<vmem>>, %arg3: memref<8x16x16xf32, #tpu.memory_space<vmem>>) attributes {dimension_semantics = [#tpu.dimension_semantics<parallel>], iteration_bounds = array<i64: 1>, scalar_prefetch = 0 : i64, scratch_operands = 0 : i64, tpu.core_type = #tpu.core_type<tc>, window_params = [{pipeline_mode = #tpu.pipeline_mode<synchronous>, transform_indices = @transform_0, window_bounds = array<i64: 16, 16>}, {transform_indices = @transform_1, window_bounds = array<i64: 8, 16, 16>}, {transform_indices = @transform_2, window_bounds = array<i64: 8, 16, 16>}]} {
    %c0_i32 = arith.constant 0 : i32
    %c8_i32 = arith.constant 8 : i32
    %0 = arith.addi %c0_i32, %c8_i32 : i32
    %c1_i32 = arith.constant 1 : i32
    scf.for %arg4 = %c0_i32 to %0 step %c1_i32  : i32 {
      %c0 = arith.constant 0 : index
      %c0_1 = arith.constant 0 : index
      %1 = vector.load %arg1[%c0, %c0_1] : memref<16x16xf32, #tpu.memory_space<vmem>>, vector<16x16xf32>
      %2 = arith.index_cast %arg4 : i32 to index
      %c0_2 = arith.constant 0 : index
      %c0_3 = arith.constant 0 : index
      %3 = vector.load %arg2[%2, %c0_2, %c0_3] : memref<8x16x16xf32, #tpu.memory_space<vmem>>, vector<1x16x16xf32>
      %4 = vector.shape_cast %3 : vector<1x16x16xf32> to vector<16x16xf32>
      %cst = arith.constant dense<0.000000e+00> : vector<16x16xf32>
      %5 = tpu.matmul %1, %4, %cst {dimension_numbers = #tpu.dot_dimension_numbers<[1], [0], [0], [1], [0, 0, 1, 1], [], []>} : vector<16x16xf32>, vector<16x16xf32>, vector<16x16xf32> -> vector<16x16xf32>
      %6 = arith.index_cast %arg4 : i32 to index
      %c0_4 = arith.constant 0 : index
      %c0_5 = arith.constant 0 : index
      %7 = vector.load %arg3[%6, %c0_4, %c0_5] : memref<8x16x16xf32, #tpu.memory_space<vmem>>, vector<1x16x16xf32>
      %8 = vector.shape_cast %7 : vector<1x16x16xf32> to vector<16x16xf32>
      %9 = vector.shape_cast %5 : vector<16x16xf32> to vector<1x16x16xf32>
      tpu.vector_store %arg3[%6, %c0_4, %c0_5], %9 {strides = array<i32>} : memref<8x16x16xf32, #tpu.memory_space<vmem>>, vector<1x16x16xf32>,
    }
    %c8_i32_0 = arith.constant 8 : i32
    return
  }
  func.func @transform_0(%arg0: i32) -> (i32, i32) {
    %c0_i32 = arith.constant 0 : i32
    %c0_i32_0 = arith.constant 0 : i32
    %c0_i32_1 = arith.constant 0 : i32
    return %c0_i32, %c0_i32_0 : i32, i32
  }
  func.func @transform_1(%arg0: i32) -> (i32, i32, i32) {
    %c0_i32 = arith.constant 0 : i32
    %c0_i32_0 = arith.constant 0 : i32
    %c0_i32_1 = arith.constant 0 : i32
    return %arg0, %c0_i32, %c0_i32_0 : i32, i32, i32
  }
  func.func @transform_2(%arg0: i32) -> (i32, i32, i32) {
    %c0_i32 = arith.constant 0 : i32
    %c0_i32_0 = arith.constant 0 : i32
    %c0_i32_1 = arith.constant 0 : i32
    return %arg0, %c0_i32, %c0_i32_0 : i32, i32, i32
  }
}

</mosaic_0001>

<llo_original>
// kernel: nconv.1
$region0: #{nconv.1}
  #allocation0 [shape = 'u32[]', space=smem, size = 0x4, offset = 0x4, fixed_abs, tag = 'smem constant byte address 0x4 - core index']
  #allocation1 [shape = 'u32[144,128]{1,0:T(1,128)}', space=vmem, size = 0x12000, scoped, tag = 'internal scratch']
  %s0 = inlined_call_operand.vmem [shape: f32[16,16], index: 0, kind: input, shape index: {}]
  %s1 = inlined_call_operand.hbm [shape: f32[8,16,16], index: 1, kind: input, shape index: {}]
  %s2 = inlined_call_operand.hbm [shape: f32[8,16,16], index: 2, kind: output, shape index: {}]
  %s3 = sld [smem:[#allocation0]]
  $region29: #{nconv.1} parent=0
    _
  %s5 = ssub.s32 1, %s3
  %s6 = scalar_select 0, %s5, %s3
  $region1: #{nconv.1} parent=0
    #allocation2 [shape = 'u8[65536]{0}', space=vmem, size = 0x10000, scoped, tag = 'input window, operand 1, single buffered']
    #allocation3 [shape = 's32[1]{0}', space=sflag, size = 0x4, scoped, tag = 'scoped memory for nconv.1']
    #allocation4 [shape = 's32[1]{0}', space=sflag, size = 0x4, scoped, tag = 'scoped memory for nconv.1']
    #allocation5 [shape = 'u8[65536]{0}', space=vmem, size = 0x10000, scoped, tag = 'output window, operand 0, single buffered']
    %7 = vsyncpa [#allocation3], 0
    %8 = vsyncpa [#allocation4], 0
    // Predicated region
    $region2: #{nconv.1} parent=1 // pred_check
      _
    $region3: #{nconv.1} parent=1 // pred_check_branch
      %10 = sbr.rel (0) target = $region5
    $region4: #{nconv.1} parent=1 // pred_region
      _
    $region5: #{nconv.1} parent=1 // pred_fallthru
      _
    // Predicated region
    $region6: #{nconv.1} parent=1 // pred_check
      _
    $region7: #{nconv.1} parent=1 // pred_check_branch
      %12 = sbr.rel (0) target = $region9
    $region8: #{nconv.1} parent=1 // pred_region
      %s14 = ssub.s32 2048, 2048
      %15 = vsyncadd [#allocation3], %s14
      %s16 = sshll.u32 [#allocation2], 4
      %s17 = int_to_ptr.vmem [resolvable:$true] %s16
      %22 = dma.hbm_to_vmem [thread:$0]  %s1, 2048, %s17, [#allocation3], 128, 128, 8
    $region9: #{nconv.1} parent=1 // pred_fallthru
      _
    // Predicated region
    $region10: #{nconv.1} parent=1 // pred_check
      _
    $region11: #{nconv.1} parent=1 // pred_check_branch
      %24 = sbr.rel (0) target = $region13
    $region12: #{nconv.1} parent=1 // pred_region
      %25 = dma.done [#allocation3], 2048
    $region13: #{nconv.1} parent=1 // pred_fallthru
      _
    loop: start=0, step=1, limit=8
    $region14: #{nconv.1} parent=1 // loop_pre_header
      _
    $region15: #{nconv.1} parent=1 // loop_header
      %s27 = sphi 0, %s31
      %p28 = scmp.ge.s32.totalorder %s27, 8
    $region16: #{nconv.1} parent=1 // loop_header_branch
      %30 = sbr.rel (%p28) target = $region20
    $region17: #{nconv.1} parent=1 // loop_body
      %v32 = vld [vmem:[%s0] sm:$0xff]
      %v33 = vld [vmem:[%s0 + $0x8] sm:$0xff]
      %s34 = smul.u32 %s27, 16
      %s35 = scalar_lea.vmem [#allocation2], %s34
      %v36 = vld [vmem:[%s35] sm:$0xff]
      %v37 = vld [vmem:[%s35 + $0x8] sm:$0xff]
      %vm38 = vcmask 130048
      %v40 = vsel %vm38, %v32, 0
      %v43 = vsel %vm38, %v33, 0
      %45 = vmatprep.subr.mxu0 0.0
      %46 = vmatpush1.msra.mxu0 %v36
      %47 = vmatprep.subr.mxu0 0.0
      %48 = vmatpush1.msra.mxu0 %v37
      %49 = vmatprep.subr.mxu0 0.0
      %50 = vmatpush1.msra.mxu0 0.0
      %51 = vmatprep.subr.mxu0 0.0
      %52 = vmatpush1.msra.mxu0 0.0
      %53 = vmatprep.subr.mxu0 0.0
      %54 = vmatpush1.msra.mxu0 0.0
      %55 = vmatprep.subr.mxu0 0.0
      %56 = vmatpush1.msra.mxu0 0.0
      %57 = vmatprep.subr.mxu0 0.0
      %58 = vmatpush1.msra.mxu0 0.0
      %59 = vmatprep.subr.mxu0 0.0
      %60 = vmatpush1.msra.mxu0 0.0
      %61 = vmatprep.subr.mxu0 0.0
      %62 = vmatpush1.msra.mxu0 0.0
      %63 = vmatprep.subr.mxu0 0.0
      %64 = vmatpush1.msra.mxu0 0.0
      %65 = vmatprep.subr.mxu0 0.0
      %66 = vmatpush1.msra.mxu0 0.0
      %67 = vmatprep.subr.mxu0 0.0
      %68 = vmatpush1.msra.mxu0 0.0
      %69 = vmatprep.subr.mxu0 0.0
      %70 = vmatpush1.msra.mxu0 0.0
      %71 = vmatprep.subr.mxu0 0.0
      %72 = vmatpush1.msra.mxu0 0.0
      %73 = vmatprep.subr.mxu0 0.0
      %74 = vmatpush1.msra.mxu0 0.0
      %75 = vmatprep.subr.mxu0 0.0
      %76 = vmatpush1.msra.mxu0 0.0
      %77 = vmatprep.subr.mxu0 0.0
      %78 = vmatpush1.msra.mxu0 0.0
      %79 = vmatprep.subr.mxu0 0.0
      %80 = vmatpush1.msra.mxu0 0.0
      %81 = vmatprep.subr.mxu0 0.0
      %82 = vmatpush1.msra.mxu0 0.0
      %83 = vmatprep.subr.mxu0 0.0
      %84 = vmatpush1.msra.mxu0 0.0
      %85 = vmatprep.subr.mxu0 0.0
      %86 = vmatpush1.msra.mxu0 0.0
      %87 = vmatprep.subr.mxu0 0.0
      %88 = vmatpush1.msra.mxu0 0.0
      %89 = vmatprep.subr.mxu0 0.0
      %90 = vmatpush1.msra.mxu0 0.0
      %91 = vmatprep.subr.mxu0 0.0
      %92 = vmatpush1.msra.mxu0 0.0
      %93 = vmatprep.subr.mxu0 0.0
      %94 = vmatpush1.msra.mxu0 0.0
      %95 = vmatprep.subr.mxu0 0.0
      %96 = vmatpush1.msra.mxu0 0.0
      %97 = vmatprep.subr.mxu0 0.0
      %98 = vmatpush1.msra.mxu0 0.0
      %99 = vmatprep.subr.mxu0 0.0
      %100 = vmatpush1.msra.mxu0 0.0
      %101 = vmatprep.subr.mxu0 0.0
      %102 = vmatpush1.msra.mxu0 0.0
      %103 = vmatprep.subr.mxu0 0.0
      %104 = vmatpush1.msra.mxu0 0.0
      %105 = vmatprep.subr.mxu0 0.0
      %106 = vmatpush1.msra.mxu0 0.0
      %107 = vmatprep.subr.mxu0 0.0
      %108 = vmatpush1.msra.mxu0 0.0
      %109 = vmatprep.mubr.f32.mxu0 0.0
      %110 = vmatmul.mubr.f32.gmra.mrb[0].mxu0 %v40
      %v111 = vpop.f32.mrb[0].mxu0
      %v112 = vadd.f32 0.0, %v111
      %v113 = vpop.f32.mrb[0].mxu0
      %114 = vmatprep.mubr.f32.mxu0 0.0
      %115 = vmatmul.mubr.f32.gmra.mrb[0].mxu0 %v43
      %v116 = vpop.f32.mrb[0].mxu0
      %v117 = vadd.f32 0.0, %v116
      %v118 = vpop.f32.mrb[0].mxu0
      %119 = vdwg.mxu0
      %s120 = scalar_lea.vmem [#allocation5], %s34
      %121 = vst.msk [vmem:[%s120] sm:$0xff] %vm38, %v112
      %122 = vst.msk [vmem:[%s120 + $0x8] sm:$0xff] %vm38, %v117
    $region18: #{nconv.1} parent=1 // loop_footer
      %s31 = sadd.s32 1, %s27
    $region19: #{nconv.1} parent=1 // loop_footer_branch
      %26 = sbr.rel target = $region15
    $region20: #{nconv.1} parent=1 // loop_exit
      _
    // Predicated region
    $region21: #{nconv.1} parent=1 // pred_check
      _
    $region22: #{nconv.1} parent=1 // pred_check_branch
      %124 = sbr.rel (0) target = $region24
    $region23: #{nconv.1} parent=1 // pred_region
      %s126 = ssub.s32 2048, 2048
      %127 = vsyncadd [#allocation4], %s126
      %s128 = sshll.u32 [#allocation5], 4
      %s129 = int_to_ptr.vmem [resolvable:$true] %s128
      %134 = dma.vmem_to_hbm [thread:$0]  %s129, 2048, %s2, [#allocation4], 128, 128, 8
    $region24: #{nconv.1} parent=1 // pred_fallthru
      _
    // Predicated region
    $region25: #{nconv.1} parent=1 // pred_check
      _
    $region26: #{nconv.1} parent=1 // pred_check_branch
      %136 = sbr.rel (0) target = $region28
    $region27: #{nconv.1} parent=1 // pred_region
      %137 = dma.done [#allocation4], 2048
    $region28: #{nconv.1} parent=1 // pred_fallthru
      _
    %138 = vsyncpa [#allocation3], 1
    %139 = vsyncpa [#allocation4], 1

</llo_original>
